<compile_context>
chip_gen: v6e
topology: v6e:2x2x1
jax: 0.10.0
libtpu: 0.0.40
codegen_flags: <defaults>
</compile_context>

<pallas_src>
import jax
import jax.numpy as jnp
from jax.experimental import pallas as pl
from jax.experimental.pallas import tpu as pltpu


def _fused_self_attn_kernel(x_ref, w_ref, b_ref, out_ref, attn_ref):
    """One grid step = `Bt` batches, full sequence.

    x_ref:    (Bt, S, D)  bf16 activations.
    w_ref:    (D, 3D)     bf16 pre-transposed [Wq | Wk | Wv]; Wq pre-scaled by
                          1/sqrt(D).  Resident across grid steps.
    b_ref:    (1, 3D)     f32 biases [bq | bk | bv] (bq pre-scaled).
    out_ref:  (Bt, S, D)  f32 attention output.
    attn_ref: (Bt, S, S)  attention weights (f32 by default, matching torch).
    """
    bt, s, d = x_ref.shape

    # ---- fused Q/K/V projection: one MXU pass, (Bt*S, 3D) output slab ----
    x2d = x_ref[...].reshape(bt * s, d)
    qkv = jnp.dot(x2d, w_ref[...], preferred_element_type=jnp.float32) + b_ref[...]
    q = qkv[:, :d].reshape(bt, s, d)          # already carries the 1/sqrt(D) scale
    k = qkv[:, d:2 * d].reshape(bt, s, d)
    v = qkv[:, 2 * d:].reshape(bt, s, d)

    # ---- attention scores: contraction over the shared feature axis ----
    # (no transposed K tile is materialized; batched dot_general over b)
    scores = jnp.einsum('bqd,bkd->bqk', q, k,
                        preferred_element_type=jnp.float32)          # (Bt, S, S)

    # ---- numerically-stable softmax with EXACT normalization ----
    m = jnp.max(scores, axis=-1, keepdims=True)
    e = jnp.exp(scores - m)
    denom = jnp.sum(e, axis=-1, keepdims=True)
    w = e * pl.reciprocal(denom, approx=False)                       # (Bt, S, S)

    out = jnp.einsum('bqk,bkd->bqd', w, v,
                     preferred_element_type=jnp.float32)             # (Bt, S, D)

    out_ref[...] = out.astype(out_ref.dtype)
    attn_ref[...] = w.astype(attn_ref.dtype)


def _pick_batch_tile(B, S, D, budget_bytes):
    """Largest divisor of B whose per-step VMEM footprint fits the budget."""
    per_b = (2 * S * D * 2          # x input (bf16), double-buffered
             + 2 * S * D * 4        # out (f32), double-buffered
             + 2 * S * S * 4        # attn (f32), double-buffered
             + 4 * S * 3 * D * 4    # qkv / q / k / v intermediates (f32)
             + 3 * S * S * 4)       # scores / e / w intermediates (f32)
    bt = max(1, min(B, budget_bytes // max(per_b, 1)))
    while B % bt:                   # keep grid blocks exact (no ragged tail)
        bt -= 1
    return bt


def self_attention(x, wq, wk, wv, bq, bk, bv, *,
                   compute_dtype=jnp.bfloat16, attn_dtype=jnp.float32):
    """x: (B, S, D) f32.  wq/wk/wv: (D, D) nn.Linear weights (out, in),
    bq/bk/bv: (D,) biases.  Returns (out (B,S,D) f32, attn (B,S,S) attn_dtype)."""
    B, S, D = x.shape
    scale = 1.0 / (float(D) ** 0.5)

    # nn.Linear computes x @ W^T + b with W of shape (out, in): pre-transpose
    # once in the wrapper and concatenate into a single (D, 3D) weight so the
    # projection is one MXU pass.  Fold the 1/sqrt(D) attention scale into the
    # Q projection (in f32, then cast) so neither Q nor the (S,S) scores get
    # scaled in-kernel.
    w_qkv = jnp.concatenate(
        [(wq.astype(jnp.float32) * scale).T,
         wk.astype(jnp.float32).T,
         wv.astype(jnp.float32).T], axis=1).astype(compute_dtype)      # (D, 3D)
    b_qkv = jnp.concatenate(
        [bq.astype(jnp.float32) * scale,
         bk.astype(jnp.float32),
         bv.astype(jnp.float32)]).reshape(1, 3 * D)                    # (1, 3D)

    x_c = x.astype(compute_dtype)

    bt = _pick_batch_tile(B, S, D, budget_bytes=40 << 20)
    grid = (B // bt,)

    # Explicit scoped-VMEM limit sized from the tile choice (capped at 56 MiB
    # so the same limit is also valid on v7x's 64 MiB VMEM).
    est = bt * (2 * S * D * 2 + 2 * S * D * 4 + 2 * S * S * 4
                + 4 * S * 3 * D * 4 + 3 * S * S * 4) + 2 * D * 3 * D * 2
    vmem_limit = int(min(max(2 * est, 32 << 20), 56 << 20))

    x_spec = pl.BlockSpec((bt, S, D), lambda b: (b, 0, 0))
    w_spec = pl.BlockSpec((D, 3 * D), lambda b: (0, 0))     # resident weights
    b_spec = pl.BlockSpec((1, 3 * D), lambda b: (0, 0))     # resident biases

    out, attn = pl.pallas_call(
        _fused_self_attn_kernel,
        out_shape=(
            jax.ShapeDtypeStruct((B, S, D), jnp.float32),
            jax.ShapeDtypeStruct((B, S, S), attn_dtype),
        ),
        grid_spec=pltpu.PrefetchScalarGridSpec(
            num_scalar_prefetch=0,
            grid=grid,
            in_specs=[x_spec, w_spec, b_spec],
            out_specs=[pl.BlockSpec((bt, S, D), lambda b: (b, 0, 0)),
                       pl.BlockSpec((bt, S, S), lambda b: (b, 0, 0))],
        ),
        compiler_params=pltpu.CompilerParams(
            dimension_semantics=("parallel",),
            vmem_limit_bytes=vmem_limit),
    )(x_c, w_qkv, b_qkv)
    return out, attn


def _reference(x, wq, wk, wv, bq, bk, bv):
    q = jnp.einsum("bsd,ed->bse", x, wq) + bq
    k = jnp.einsum("bsd,ed->bse", x, wk) + bk
    v = jnp.einsum("bsd,ed->bse", x, wv) + bv
    scores = jnp.einsum("bqd,bkd->bqk", q, k) / (x.shape[-1] ** 0.5)
    w = jax.nn.softmax(scores, axis=-1)
    out = jnp.einsum("bqk,bkd->bqd", w, v)
    return out, w


if __name__ == "__main__":
    B, S, D = 2, 8, 32  # batch, sequence length, input_dim

    key = jax.random.PRNGKey(0)
    kx, kq, kk, kv, kbq, kbk, kbv = jax.random.split(key, 7)

    x = jax.random.normal(kx, (B, S, D), dtype=jnp.float32)
    # Deterministic synthetic parameters mimicking nn.Linear shapes (D, D)/(D,).
    bound = 1.0 / (D ** 0.5)
    wq = jax.random.uniform(kq, (D, D), jnp.float32, -bound, bound)
    wk = jax.random.uniform(kk, (D, D), jnp.float32, -bound, bound)
    wv = jax.random.uniform(kv, (D, D), jnp.float32, -bound, bound)
    bq = jax.random.uniform(kbq, (D,), jnp.float32, -bound, bound)
    bk = jax.random.uniform(kbk, (D,), jnp.float32, -bound, bound)
    bv = jax.random.uniform(kbv, (D,), jnp.float32, -bound, bound)

    out, attn = self_attention(x, wq, wk, wv, bq, bk, bv)
    jax.block_until_ready((out, attn))

    # Reference is pure f32; kernel uses bf16 operands with f32 accumulation,
    # so tolerances are loosened accordingly.
    ref_out, ref_attn = _reference(x, wq, wk, wv, bq, bk, bv)
    assert jnp.allclose(out, ref_out, atol=5e-2, rtol=5e-2)
    assert jnp.allclose(attn, ref_attn, atol=3e-2, rtol=3e-2)

    print("KERNEL_OK")
</pallas_src>

<mosaic_0001>
module attributes {stable_mosaic.version = 11 : i64} {
  func.func @_fused_self_attn_kernel(%arg0: i32, %arg1: memref<2x8x32xbf16, #tpu.memory_space<vmem>>, %arg2: memref<32x96xbf16, #tpu.memory_space<vmem>>, %arg3: memref<1x96xf32, #tpu.memory_space<vmem>>, %arg4: memref<2x8x32xf32, #tpu.memory_space<vmem>>, %arg5: memref<2x8x8xf32, #tpu.memory_space<vmem>>) attributes {dimension_semantics = [#tpu.dimension_semantics<parallel>], iteration_bounds = array<i64: 1>, scalar_prefetch = 0 : i64, scratch_operands = 0 : i64, tpu.core_type = #tpu.core_type<tc>, window_params = [{transform_indices = @transform_0, window_bounds = array<i64: 2, 8, 32>}, {pipeline_mode = #tpu.pipeline_mode<synchronous>, transform_indices = @transform_1, window_bounds = array<i64: 32, 96>}, {pipeline_mode = #tpu.pipeline_mode<synchronous>, transform_indices = @transform_2, window_bounds = array<i64: 1, 96>}, {transform_indices = @transform_3, window_bounds = array<i64: 2, 8, 32>}, {transform_indices = @transform_4, window_bounds = array<i64: 2, 8, 8>}]} {
    %c0 = arith.constant 0 : index
    %c0_0 = arith.constant 0 : index
    %c0_1 = arith.constant 0 : index
    %0 = vector.load %arg1[%c0, %c0_0, %c0_1] : memref<2x8x32xbf16, #tpu.memory_space<vmem>>, vector<2x8x32xbf16>
    %1 = vector.shape_cast %0 : vector<2x8x32xbf16> to vector<16x32xbf16>
    %c0_2 = arith.constant 0 : index
    %c0_3 = arith.constant 0 : index
    %2 = vector.load %arg2[%c0_2, %c0_3] : memref<32x96xbf16, #tpu.memory_space<vmem>>, vector<32x96xbf16>
    %cst = arith.constant dense<0.000000e+00> : vector<16x96xf32>
    %3 = tpu.matmul %1, %2, %cst {dimension_numbers = #tpu.dot_dimension_numbers<[1], [0], [0], [1], [0, 0, 1, 1], [], []>} : vector<16x32xbf16>, vector<32x96xbf16>, vector<16x96xf32> -> vector<16x96xf32>
    %c0_4 = arith.constant 0 : index
    %c0_5 = arith.constant 0 : index
    %4 = vector.load %arg3[%c0_4, %c0_5] : memref<1x96xf32, #tpu.memory_space<vmem>>, vector<1x96xf32>
    %5 = vector.broadcast %4 : vector<1x96xf32> to vector<16x96xf32>
    %6 = arith.addf %3, %5 : vector<16x96xf32>
    %7 = vector.extract_strided_slice %6 {offsets = [0, 0], sizes = [16, 32], strides = [1, 1]} : vector<16x96xf32> to vector<16x32xf32>
    %8 = vector.shape_cast %7 : vector<16x32xf32> to vector<2x8x32xf32>
    %9 = vector.extract_strided_slice %6 {offsets = [0, 32], sizes = [16, 32], strides = [1, 1]} : vector<16x96xf32> to vector<16x32xf32>
    %10 = vector.shape_cast %9 : vector<16x32xf32> to vector<2x8x32xf32>
    %11 = vector.extract_strided_slice %6 {offsets = [0, 64], sizes = [16, 32], strides = [1, 1]} : vector<16x96xf32> to vector<16x32xf32>
    %12 = vector.shape_cast %11 : vector<16x32xf32> to vector<2x8x32xf32>
    "tpu.trace_start"() <{level = 10 : i32, message = "bqd,bkd->bqk"}> : () -> ()
    %cst_6 = arith.constant dense<0.000000e+00> : vector<2x8x8xf32>
    %13 = tpu.matmul %8, %10, %cst_6 {dimension_numbers = #tpu.dot_dimension_numbers<[2], [2], [1], [1], [0, 0, 0, 1, 1, 1], [0], [0]>} : vector<2x8x32xf32>, vector<2x8x32xf32>, vector<2x8x8xf32> -> vector<2x8x8xf32>
    "tpu.trace_stop"() : () -> ()
    %cst_7 = arith.constant dense<0xFF800000> : vector<2x8xf32>
    %14 = vector.multi_reduction <maximumf>, %13, %cst_7 [2] : vector<2x8x8xf32> to vector<2x8xf32>
    %15 = vector.shape_cast %14 : vector<2x8xf32> to vector<2x8x1xf32>
    %16 = vector.broadcast %15 : vector<2x8x1xf32> to vector<2x8x8xf32>
    %17 = arith.subf %13, %16 : vector<2x8x8xf32>
    %18 = math.exp %17 : vector<2x8x8xf32>
    %cst_8 = arith.constant dense<0.000000e+00> : vector<2x8xf32>
    %19 = vector.multi_reduction <add>, %18, %cst_8 [2] : vector<2x8x8xf32> to vector<2x8xf32>
    %20 = vector.shape_cast %19 : vector<2x8xf32> to vector<2x8x1xf32>
    %21 = tpu.reciprocal %20 : vector<2x8x1xf32> -> vector<2x8x1xf32>
    %22 = vector.broadcast %21 : vector<2x8x1xf32> to vector<2x8x8xf32>
    %23 = arith.mulf %18, %22 : vector<2x8x8xf32>
    "tpu.trace_start"() <{level = 10 : i32, message = "bqk,bkd->bqd"}> : () -> ()
    %cst_9 = arith.constant dense<0.000000e+00> : vector<2x8x32xf32>
    %24 = tpu.matmul %23, %12, %cst_9 {dimension_numbers = #tpu.dot_dimension_numbers<[2], [1], [1], [2], [0, 0, 0, 1, 1, 2], [0], [0]>} : vector<2x8x8xf32>, vector<2x8x32xf32>, vector<2x8x32xf32> -> vector<2x8x32xf32>
    "tpu.trace_stop"() : () -> ()
    %c0_10 = arith.constant 0 : index
    %c0_11 = arith.constant 0 : index
    %c0_12 = arith.constant 0 : index
    %25 = vector.load %arg4[%c0_10, %c0_11, %c0_12] : memref<2x8x32xf32, #tpu.memory_space<vmem>>, vector<2x8x32xf32>
    tpu.vector_store %arg4[%c0_10, %c0_11, %c0_12], %24 {strides = array<i32>} : memref<2x8x32xf32, #tpu.memory_space<vmem>>, vector<2x8x32xf32>,
    %c0_13 = arith.constant 0 : index
    %c0_14 = arith.constant 0 : index
    %c0_15 = arith.constant 0 : index
    %26 = vector.load %arg5[%c0_13, %c0_14, %c0_15] : memref<2x8x8xf32, #tpu.memory_space<vmem>>, vector<2x8x8xf32>
    tpu.vector_store %arg5[%c0_13, %c0_14, %c0_15], %23 {strides = array<i32>} : memref<2x8x8xf32, #tpu.memory_space<vmem>>, vector<2x8x8xf32>,
    return
  }
  func.func @transform_0(%arg0: i32) -> (i32, i32, i32) {
    %c0_i32 = arith.constant 0 : i32
    %c0_i32_0 = arith.constant 0 : i32
    %c0_i32_1 = arith.constant 0 : i32
    return %arg0, %c0_i32, %c0_i32_0 : i32, i32, i32
  }
  func.func @transform_1(%arg0: i32) -> (i32, i32) {
    %c0_i32 = arith.constant 0 : i32
    %c0_i32_0 = arith.constant 0 : i32
    %c0_i32_1 = arith.constant 0 : i32
    return %c0_i32, %c0_i32_0 : i32, i32
  }
  func.func @transform_2(%arg0: i32) -> (i32, i32) {
    %c0_i32 = arith.constant 0 : i32
    %c0_i32_0 = arith.constant 0 : i32
    %c0_i32_1 = arith.constant 0 : i32
    return %c0_i32, %c0_i32_0 : i32, i32
  }
  func.func @transform_3(%arg0: i32) -> (i32, i32, i32) {
    %c0_i32 = arith.constant 0 : i32
    %c0_i32_0 = arith.constant 0 : i32
    %c0_i32_1 = arith.constant 0 : i32
    return %arg0, %c0_i32, %c0_i32_0 : i32, i32, i32
  }
  func.func @transform_4(%arg0: i32) -> (i32, i32, i32) {
    %c0_i32 = arith.constant 0 : i32
    %c0_i32_0 = arith.constant 0 : i32
    %c0_i32_1 = arith.constant 0 : i32
    return %arg0, %c0_i32, %c0_i32_0 : i32, i32, i32
  }
}

</mosaic_0001>

<llo_original>
// kernel: tpu_custom_call.1
$region0: #{tpu_custom_call.1}
  #allocation0 [shape = 'u32[]', space=smem, size = 0x4, offset = 0x4, fixed_abs, tag = 'smem constant byte address 0x4 - core index']
  #allocation1 [shape = 'u32[144,128]{1,0:T(1,128)}', space=vmem, size = 0x12000, scoped, tag = 'internal scratch']
  %s0 = inlined_call_operand.hbm [shape: bf16[2,8,32], index: 0, kind: input, shape index: {}]
  %s1 = inlined_call_operand.hbm [shape: bf16[32,96], index: 1, kind: input, shape index: {}]
  %s2 = inlined_call_operand.vmem [shape: f32[1,96], index: 2, kind: input, shape index: {}]
  %s3 = inlined_call_operand.hbm [shape: f32[2,8,32], index: 3, kind: output, shape index: {0}]
  %s4 = inlined_call_operand.hbm [shape: f32[2,8,8], index: 4, kind: output, shape index: {1}]
  %5 = xla_tuple %s3, %s4
  %s6 = sld [smem:[#allocation0]]
  $region38: #{tpu_custom_call.1} parent=0
    _
  %s8 = ssub.s32 1, %s6
  %s9 = scalar_select 0, %s8, %s6
  $region1: #{tpu_custom_call.1} parent=0
    #allocation2 [shape = 'u8[4096]{0}', space=vmem, size = 0x1000, scoped, tag = 'input window, operand 0, single buffered']
    #allocation3 [shape = 's32[1]{0}', space=sflag, size = 0x4, scoped, tag = 'scoped memory for tpu_custom_call.1']
    #allocation4 [shape = 's32[1]{0}', space=sflag, size = 0x4, scoped, tag = 'scoped memory for tpu_custom_call.1']
    #allocation5 [shape = 'u8[8192]{0}', space=vmem, size = 0x2000, scoped, tag = 'input window, operand 1, single buffered']
    #allocation6 [shape = 's32[1]{0}', space=sflag, size = 0x4, scoped, tag = 'scoped memory for tpu_custom_call.1']
    #allocation7 [shape = 'u8[8192]{0}', space=vmem, size = 0x2000, scoped, tag = 'output window, operand 0, single buffered']
    #allocation8 [shape = 'u8[8192]{0}', space=vmem, size = 0x2000, scoped, tag = 'output window, operand 1, single buffered']
    #allocation9 [shape = 's32[1]{0}', space=sflag, size = 0x4, scoped, tag = 'scoped memory for tpu_custom_call.1']
    %10 = vsyncpa [#allocation3], 0
    %11 = vsyncpa [#allocation6], 0
    %12 = vsyncpa [#allocation4], 0
    %13 = vsyncpa [#allocation9], 0
    // Predicated region
    $region2: #{tpu_custom_call.1} parent=1 // pred_check
      _
    $region3: #{tpu_custom_call.1} parent=1 // pred_check_branch
      %15 = sbr.rel (0) target = $region5
    $region4: #{tpu_custom_call.1} parent=1 // pred_region
      %s17 = ssub.s32 128, 128
      %18 = vsyncadd [#allocation3], %s17
      %s19 = sshll.u32 [#allocation2], 4
      %s20 = int_to_ptr.vmem [resolvable:$true] %s19
      %25 = dma.hbm_to_vmem [thread:$0]  %s0, 128, %s20, [#allocation3], 64, 64, 4
    $region5: #{tpu_custom_call.1} parent=1 // pred_fallthru
      _
    // Predicated region
    $region6: #{tpu_custom_call.1} parent=1 // pred_check
      _
    $region7: #{tpu_custom_call.1} parent=1 // pred_check_branch
      %27 = sbr.rel (0) target = $region9
    $region8: #{tpu_custom_call.1} parent=1 // pred_region
      %s29 = ssub.s32 256, 256
      %30 = vsyncadd [#allocation6], %s29
      %s31 = sshll.u32 [#allocation5], 4
      %s32 = int_to_ptr.vmem [resolvable:$true] %s31
      %37 = dma.hbm_to_vmem [thread:$0]  %s1, 256, %s32, [#allocation6], 64, 64, 4
    $region9: #{tpu_custom_call.1} parent=1 // pred_fallthru
      _
    // Predicated region
    $region10: #{tpu_custom_call.1} parent=1 // pred_check
      _
    $region11: #{tpu_custom_call.1} parent=1 // pred_check_branch
      %39 = sbr.rel (0) target = $region13
    $region12: #{tpu_custom_call.1} parent=1 // pred_region
      _
    $region13: #{tpu_custom_call.1} parent=1 // pred_fallthru
      _
    // Predicated region
    $region14: #{tpu_custom_call.1} parent=1 // pred_check
      _
    $region15: #{tpu_custom_call.1} parent=1 // pred_check_branch
      %41 = sbr.rel (0) target = $region17
    $region16: #{tpu_custom_call.1} parent=1 // pred_region
      %42 = dma.done [#allocation3], 128
    $region17: #{tpu_custom_call.1} parent=1 // pred_fallthru
      _
    // Predicated region
    $region18: #{tpu_custom_call.1} parent=1 // pred_check
      _
    $region19: #{tpu_custom_call.1} parent=1 // pred_check_branch
      %44 = sbr.rel (0) target = $region21
    $region20: #{tpu_custom_call.1} parent=1 // pred_region
      %45 = dma.done [#allocation6], 256
    $region21: #{tpu_custom_call.1} parent=1 // pred_fallthru
      _
    %v47 = vld [vmem:[#allocation2] sm:$0xf]
    %v48 = vld [vmem:[#allocation2 + $0x4] sm:$0xf]
    %v49 = vld [vmem:[#allocation5] sm:$0xf]
    %v50 = vld [vmem:[#allocation5 + $0x4] sm:$0xf]
    %v51 = vld [vmem:[#allocation5 + $0x8] sm:$0xf]
    %v52 = vld [vmem:[#allocation5 + $0xc] sm:$0xf]
    %v53 = vld [vmem:[%s2] sm:$0x1]
    %v55 = vlaneseq
    %v56 = vshrl.u32 %v55, 7
    %v57 = vsub.s32 0, %v56
    %v58 = vrot.slane %v53, %v57
    %v62 = vunpack.c.l.b16 %v47
    %v63 = vunpack.c.l.b16 %v48
    %v64 = vpack.c.b16 %v63, %v62
    %v69 = vunpack.c.l.b16 %v49
    %v70 = vunpack.c.l.b16 %v50
    %v71 = vunpack.c.l.b16 %v51
    %v72 = vunpack.c.l.b16 %v52
    %v73 = vpack.c.b16 %v70, %v69
    %v74 = vpack.c.b16 %v72, %v71
    %vm77 = vcmask 261120
    %v79 = vsel %vm77, %v64, 0
    %81 = vmatprep.subr.bf16.mxu0 0
    %82 = vmatpush1.bf16.msra.mxu0 0
    %83 = vmatprep.subr.bf16.mxu0 0
    %84 = vmatpush1.bf16.msra.mxu0 0
    %85 = vmatprep.subr.bf16.mxu0 0
    %86 = vmatpush1.bf16.msra.mxu0 0
    %87 = vmatprep.subr.bf16.mxu0 0
    %88 = vmatpush1.bf16.msra.mxu0 0
    %89 = vmatprep.subr.bf16.mxu0 0
    %90 = vmatpush1.bf16.msra.mxu0 0
    %91 = vmatprep.subr.bf16.mxu0 0
    %92 = vmatpush1.bf16.msra.mxu0 0
    %93 = vmatprep.subr.bf16.mxu0 0
    %94 = vmatpush1.bf16.msra.mxu0 %v74
    %95 = vmatprep.subr.bf16.mxu0 0
    %96 = vmatpush1.bf16.msra.mxu0 %v73
    %97 = vmatprep.subr.bf16.mxu0 0
    %98 = vmatpush2.bf16.msra.mxu0 0
    %99 = vmatprep.subr.bf16.mxu0 0
    %100 = vmatpush2.bf16.msra.mxu0 0
    %101 = vmatprep.subr.bf16.mxu0 0
    %102 = vmatpush2.bf16.msra.mxu0 0
    %103 = vmatprep.subr.bf16.mxu0 0
    %104 = vmatpush2.bf16.msra.mxu0 0
    %105 = vmatprep.subr.bf16.mxu0 0
    %106 = vmatpush2.bf16.msra.mxu0 0
    %107 = vmatprep.subr.bf16.mxu0 0
    %108 = vmatpush2.bf16.msra.mxu0 0
    %109 = vmatprep.subr.bf16.mxu0 0
    %110 = vmatpush2.bf16.msra.mxu0 0
    %111 = vmatprep.subr.bf16.mxu0 0
    %112 = vmatpush2.bf16.msra.mxu0 0
    %113 = vmatprep.mubr.bf16.mxu0 0
    %114 = vmatmul.mubr.bf16.gmra.mxu0 %v79
    %v115 = vpop.f32.mrf.mxu0
    %v116 = vadd.f32 %v58, %v115
    %v117 = vpop.f32.mrf.mxu0
    %v118 = vpop.f32.mrf.mxu0
    %v119 = vadd.f32 %v58, %v118
    %v120 = vpop.f32.mrf.mxu0
    %121 = vdwg.mxu0
    %123 = vrot.lane.b32.xlu0 %v116, 96
    %v124 = vpop.permute.xlu0 %123
    %v125 = vsel %vm77, %v116, 0
    %v127 = vsel %vm77, %v124, 0
    %129 = vmatprep.subr.mxu0 0.0
    %130 = vmatpush1.xpose.msra.mxu0 0.0
    %131 = vmatprep.subr.mxu0 0.0
    %132 = vmatpush1.xpose.msra.mxu0 0.0
    %133 = vmatprep.subr.mxu0 0.0
    %134 = vmatpush1.xpose.msra.mxu0 0.0
    %135 = vmatprep.subr.mxu0 0.0
    %136 = vmatpush1.xpose.msra.mxu0 0.0
    %137 = vmatprep.subr.mxu0 0.0
    %138 = vmatpush1.xpose.msra.mxu0 0.0
    %139 = vmatprep.subr.mxu0 0.0
    %140 = vmatpush1.xpose.msra.mxu0 0.0
    %141 = vmatprep.subr.mxu0 0.0
    %142 = vmatpush1.xpose.msra.mxu0 0.0
    %143 = vmatprep.subr.mxu0 0.0
    %144 = vmatpush1.xpose.msra.mxu0 0.0
    %145 = vmatprep.subr.mxu0 0.0
    %146 = vmatpush1.xpose.msra.mxu0 0.0
    %147 = vmatprep.subr.mxu0 0.0
    %148 = vmatpush1.xpose.msra.mxu0 0.0
    %149 = vmatprep.subr.mxu0 0.0
    %150 = vmatpush1.xpose.msra.mxu0 0.0
    %151 = vmatprep.subr.mxu0 0.0
    %152 = vmatpush1.xpose.msra.mxu0 0.0
    %153 = vmatprep.subr.mxu0 0.0
    %154 = vmatpush1.xpose.msra.mxu0 0.0
    %155 = vmatprep.subr.mxu0 0.0
    %156 = vmatpush1.xpose.msra.mxu0 0.0
    %157 = vmatprep.subr.mxu0 0.0
    %158 = vmatpush1.xpose.msra.mxu0 0.0
    %159 = vmatprep.subr.mxu0 0.0
    %160 = vmatpush1.xpose.msra.mxu0 %v127
    %161 = vmatprep.subr.mxu0 0.0
    %162 = vmatpush2.xpose.msra.mxu0 0.0
    %163 = vmatprep.subr.mxu0 0.0
    %164 = vmatpush2.xpose.msra.mxu0 0.0
    %165 = vmatprep.subr.mxu0 0.0
    %166 = vmatpush2.xpose.msra.mxu0 0.0
    %167 = vmatprep.subr.mxu0 0.0
    %168 = vmatpush2.xpose.msra.mxu0 0.0
    %169 = vmatprep.subr.mxu0 0.0
    %170 = vmatpush2.xpose.msra.mxu0 0.0
    %171 = vmatprep.subr.mxu0 0.0
    %172 = vmatpush2.xpose.msra.mxu0 0.0
    %173 = vmatprep.subr.mxu0 0.0
    %174 = vmatpush2.xpose.msra.mxu0 0.0
    %175 = vmatprep.subr.mxu0 0.0
    %176 = vmatpush2.xpose.msra.mxu0 0.0
    %177 = vmatprep.subr.mxu0 0.0
    %178 = vmatpush2.xpose.msra.mxu0 0.0
    %179 = vmatprep.subr.mxu0 0.0
    %180 = vmatpush2.xpose.msra.mxu0 0.0
    %181 = vmatprep.subr.mxu0 0.0
    %182 = vmatpush2.xpose.msra.mxu0 0.0
    %183 = vmatprep.subr.mxu0 0.0
    %184 = vmatpush2.xpose.msra.mxu0 0.0
    %185 = vmatprep.subr.mxu0 0.0
    %186 = vmatpush2.xpose.msra.mxu0 0.0
    %187 = vmatprep.subr.mxu0 0.0
    %188 = vmatpush2.xpose.msra.mxu0 0.0
    %189 = vmatprep.subr.mxu0 0.0
    %190 = vmatpush2.xpose.msra.mxu0 0.0
    %191 = vmatprep.subr.mxu0 0.0
    %192 = vmatpush2.xpose.msra.mxu0 0.0
    %193 = vmatprep.mubr.f32.mxu0 0.0
    %194 = vmatmul.mubr.f32.gmra.mxu0 %v125
    %v195 = vpop.f32.mrf.mxu0
    %v196 = vadd.f32 0.0, %v195
    %v197 = vpop.f32.mrf.mxu0
    %198 = vdwg.mxu0
    %200 = vrot.lane.b32.xlu0 %v119, 96
    %v201 = vpop.permute.xlu0 %200
    %v202 = vsel %vm77, %v119, 0
    %v204 = vsel %vm77, %v201, 0
    %206 = vmatprep.subr.mxu0 0.0
    %207 = vmatpush1.xpose.msra.mxu0 0.0
    %208 = vmatprep.subr.mxu0 0.0
    %209 = vmatpush1.xpose.msra.mxu0 0.0
    %210 = vmatprep.subr.mxu0 0.0
    %211 = vmatpush1.xpose.msra.mxu0 0.0
    %212 = vmatprep.subr.mxu0 0.0
    %213 = vmatpush1.xpose.msra.mxu0 0.0
    %214 = vmatprep.subr.mxu0 0.0
    %215 = vmatpush1.xpose.msra.mxu0 0.0
    %216 = vmatprep.subr.mxu0 0.0
    %217 = vmatpush1.xpose.msra.mxu0 0.0
    %218 = vmatprep.subr.mxu0 0.0
    %219 = vmatpush1.xpose.msra.mxu0 0.0
    %220 = vmatprep.subr.mxu0 0.0
    %221 = vmatpush1.xpose.msra.mxu0 0.0
    %222 = vmatprep.subr.mxu0 0.0
    %223 = vmatpush1.xpose.msra.mxu0 0.0
    %224 = vmatprep.subr.mxu0 0.0
    %225 = vmatpush1.xpose.msra.mxu0 0.0
    %226 = vmatprep.subr.mxu0 0.0
    %227 = vmatpush1.xpose.msra.mxu0 0.0
    %228 = vmatprep.subr.mxu0 0.0
    %229 = vmatpush1.xpose.msra.mxu0 0.0
    %230 = vmatprep.subr.mxu0 0.0
    %231 = vmatpush1.xpose.msra.mxu0 0.0
    %232 = vmatprep.subr.mxu0 0.0
    %233 = vmatpush1.xpose.msra.mxu0 0.0
    %234 = vmatprep.subr.mxu0 0.0
    %235 = vmatpush1.xpose.msra.mxu0 0.0
    %236 = vmatprep.subr.mxu0 0.0
    %237 = vmatpush1.xpose.msra.mxu0 %v204
    %238 = vmatprep.subr.mxu0 0.0
    %239 = vmatpush2.xpose.msra.mxu0 0.0
    %240 = vmatprep.subr.mxu0 0.0
    %241 = vmatpush2.xpose.msra.mxu0 0.0
    %242 = vmatprep.subr.mxu0 0.0
    %243 = vmatpush2.xpose.msra.mxu0 0.0
    %244 = vmatprep.subr.mxu0 0.0
    %245 = vmatpush2.xpose.msra.mxu0 0.0
    %246 = vmatprep.subr.mxu0 0.0
    %247 = vmatpush2.xpose.msra.mxu0 0.0
    %248 = vmatprep.subr.mxu0 0.0
    %249 = vmatpush2.xpose.msra.mxu0 0.0
    %250 = vmatprep.subr.mxu0 0.0
    %251 = vmatpush2.xpose.msra.mxu0 0.0
    %252 = vmatprep.subr.mxu0 0.0
    %253 = vmatpush2.xpose.msra.mxu0 0.0
    %254 = vmatprep.subr.mxu0 0.0
    %255 = vmatpush2.xpose.msra.mxu0 0.0
    %256 = vmatprep.subr.mxu0 0.0
    %257 = vmatpush2.xpose.msra.mxu0 0.0
    %258 = vmatprep.subr.mxu0 0.0
    %259 = vmatpush2.xpose.msra.mxu0 0.0
    %260 = vmatprep.subr.mxu0 0.0
    %261 = vmatpush2.xpose.msra.mxu0 0.0
    %262 = vmatprep.subr.mxu0 0.0
    %263 = vmatpush2.xpose.msra.mxu0 0.0
    %264 = vmatprep.subr.mxu0 0.0
    %265 = vmatpush2.xpose.msra.mxu0 0.0
    %266 = vmatprep.subr.mxu0 0.0
    %267 = vmatpush2.xpose.msra.mxu0 0.0
    %268 = vmatprep.subr.mxu0 0.0
    %269 = vmatpush2.xpose.msra.mxu0 0.0
    %270 = vmatprep.mubr.f32.mxu0 0.0
    %271 = vmatmul.mubr.f32.gmra.mxu0 %v202
    %v272 = vpop.f32.mrf.mxu0
    %v273 = vadd.f32 0.0, %v272
    %v274 = vpop.f32.mrf.mxu0
    %275 = vdwg.mxu0
    %vm276 = vcmask 64512
    %v277 = vsel %vm276, %v196, -inf
    %278 = vmax.xlane.f32.xlu0 %v277
    %v279 = vpop.xlane.xlu0 %278
    %v280 = vsel %vm276, %v273, -inf
    %281 = vmax.xlane.f32.xlu0 %v280
    %v282 = vpop.xlane.xlu0 %281
    %v283 = vsub.f32 %v196, %v279
    %v284 = vsub.f32 %v273, %v282
    %v285 = vmul.f32 %v283, 1.442695
    %v286 = vpow.pop %v285
    %v287 = vmul.f32 %v284, 1.442695
    %v288 = vpow.pop %v287
    %v289 = vsel %vm276, %v286, 0.0
    %290 = vadd.xlane.f32.xlu0 %v289
    %v291 = vpop.xlane.xlu0 %290
    %v292 = vsel %vm276, %v288, 0.0
    %293 = vadd.xlane.f32.xlu0 %v292
    %v294 = vpop.xlane.xlu0 %293
    %v295 = vrcp.pop %v291
    %v296 = vrcp.pop %v294
    %v297 = vmul.f32 %v286, %v295
    %v298 = vmul.f32 %v288, %v296
    %299 = vrot.lane.b32.xlu0 %v116, 64
    %v300 = vpop.permute.xlu0 %299
    %v303 = vsel %vm276, %v297, 0
    %305 = vmatprep.subr.mxu0 0.0
    %306 = vmatpush1.msra.mxu0 0.0
    %307 = vmatprep.subr.mxu0 0.0
    %308 = vmatpush1.msra.mxu0 0.0
    %309 = vmatprep.subr.mxu0 0.0
    %310 = vmatpush1.msra.mxu0 0.0
    %311 = vmatprep.subr.mxu0 0.0
    %312 = vmatpush1.msra.mxu0 0.0
    %313 = vmatprep.subr.mxu0 0.0
    %314 = vmatpush1.msra.mxu0 0.0
    %315 = vmatprep.subr.mxu0 0.0
    %316 = vmatpush1.msra.mxu0 0.0
    %317 = vmatprep.subr.mxu0 0.0
    %318 = vmatpush1.msra.mxu0 0.0
    %319 = vmatprep.subr.mxu0 0.0
    %320 = vmatpush1.msra.mxu0 0.0
    %321 = vmatprep.subr.mxu0 0.0
    %322 = vmatpush1.msra.mxu0 0.0
    %323 = vmatprep.subr.mxu0 0.0
    %324 = vmatpush1.msra.mxu0 0.0
    %325 = vmatprep.subr.mxu0 0.0
    %326 = vmatpush1.msra.mxu0 0.0
    %327 = vmatprep.subr.mxu0 0.0
    %328 = vmatpush1.msra.mxu0 0.0
    %329 = vmatprep.subr.mxu0 0.0
    %330 = vmatpush1.msra.mxu0 0.0
    %331 = vmatprep.subr.mxu0 0.0
    %332 = vmatpush1.msra.mxu0 0.0
    %333 = vmatprep.subr.mxu0 0.0
    %334 = vmatpush1.msra.mxu0 0.0
    %335 = vmatprep.subr.mxu0 0.0
    %336 = vmatpush1.msra.mxu0 %v300
    %337 = vmatprep.subr.mxu0 0.0
    %338 = vmatpush2.msra.mxu0 0.0
    %339 = vmatprep.subr.mxu0 0.0
    %340 = vmatpush2.msra.mxu0 0.0
    %341 = vmatprep.subr.mxu0 0.0
    %342 = vmatpush2.msra.mxu0 0.0
    %343 = vmatprep.subr.mxu0 0.0
    %344 = vmatpush2.msra.mxu0 0.0
    %345 = vmatprep.subr.mxu0 0.0
    %346 = vmatpush2.msra.mxu0 0.0
    %347 = vmatprep.subr.mxu0 0.0
    %348 = vmatpush2.msra.mxu0 0.0
    %349 = vmatprep.subr.mxu0 0.0
    %350 = vmatpush2.msra.mxu0 0.0
    %351 = vmatprep.subr.mxu0 0.0
    %352 = vmatpush2.msra.mxu0 0.0
    %353 = vmatprep.subr.mxu0 0.0
    %354 = vmatpush2.msra.mxu0 0.0
    %355 = vmatprep.subr.mxu0 0.0
    %356 = vmatpush2.msra.mxu0 0.0
    %357 = vmatprep.subr.mxu0 0.0
    %358 = vmatpush2.msra.mxu0 0.0
    %359 = vmatprep.subr.mxu0 0.0
    %360 = vmatpush2.msra.mxu0 0.0
    %361 = vmatprep.subr.mxu0 0.0
    %362 = vmatpush2.msra.mxu0 0.0
    %363 = vmatprep.subr.mxu0 0.0
    %364 = vmatpush2.msra.mxu0 0.0
    %365 = vmatprep.subr.mxu0 0.0
    %366 = vmatpush2.msra.mxu0 0.0
    %367 = vmatprep.subr.mxu0 0.0
    %368 = vmatpush2.msra.mxu0 0.0
    %369 = vmatprep.mubr.f32.mxu0 0.0
    %370 = vmatmul.mubr.f32.gmra.mxu0 %v303
    %v371 = vpop.f32.mrf.mxu0
    %v372 = vadd.f32 0.0, %v371
    %v373 = vpop.f32.mrf.mxu0
    %374 = vdwg.mxu0
    %375 = vrot.lane.b32.xlu0 %v119, 64
    %v376 = vpop.permute.xlu0 %375
    %v379 = vsel %vm276, %v298, 0
    %381 = vmatprep.subr.mxu0 0.0
    %382 = vmatpush1.msra.mxu0 0.0
    %383 = vmatprep.subr.mxu0 0.0
    %384 = vmatpush1.msra.mxu0 0.0
    %385 = vmatprep.subr.mxu0 0.0
    %386 = vmatpush1.msra.mxu0 0.0
    %387 = vmatprep.subr.mxu0 0.0
    %388 = vmatpush1.msra.mxu0 0.0
    %389 = vmatprep.subr.mxu0 0.0
    %390 = vmatpush1.msra.mxu0 0.0
    %391 = vmatprep.subr.mxu0 0.0
    %392 = vmatpush1.msra.mxu0 0.0
    %393 = vmatprep.subr.mxu0 0.0
    %394 = vmatpush1.msra.mxu0 0.0
    %395 = vmatprep.subr.mxu0 0.0
    %396 = vmatpush1.msra.mxu0 0.0
    %397 = vmatprep.subr.mxu0 0.0
    %398 = vmatpush1.msra.mxu0 0.0
    %399 = vmatprep.subr.mxu0 0.0
    %400 = vmatpush1.msra.mxu0 0.0
    %401 = vmatprep.subr.mxu0 0.0
    %402 = vmatpush1.msra.mxu0 0.0
    %403 = vmatprep.subr.mxu0 0.0
    %404 = vmatpush1.msra.mxu0 0.0
    %405 = vmatprep.subr.mxu0 0.0
    %406 = vmatpush1.msra.mxu0 0.0
    %407 = vmatprep.subr.mxu0 0.0
    %408 = vmatpush1.msra.mxu0 0.0
    %409 = vmatprep.subr.mxu0 0.0
    %410 = vmatpush1.msra.mxu0 0.0
    %411 = vmatprep.subr.mxu0 0.0
    %412 = vmatpush1.msra.mxu0 %v376
    %413 = vmatprep.subr.mxu0 0.0
    %414 = vmatpush2.msra.mxu0 0.0
    %415 = vmatprep.subr.mxu0 0.0
    %416 = vmatpush2.msra.mxu0 0.0
    %417 = vmatprep.subr.mxu0 0.0
    %418 = vmatpush2.msra.mxu0 0.0
    %419 = vmatprep.subr.mxu0 0.0
    %420 = vmatpush2.msra.mxu0 0.0
    %421 = vmatprep.subr.mxu0 0.0
    %422 = vmatpush2.msra.mxu0 0.0
    %423 = vmatprep.subr.mxu0 0.0
    %424 = vmatpush2.msra.mxu0 0.0
    %425 = vmatprep.subr.mxu0 0.0
    %426 = vmatpush2.msra.mxu0 0.0
    %427 = vmatprep.subr.mxu0 0.0
    %428 = vmatpush2.msra.mxu0 0.0
    %429 = vmatprep.subr.mxu0 0.0
    %430 = vmatpush2.msra.mxu0 0.0
    %431 = vmatprep.subr.mxu0 0.0
    %432 = vmatpush2.msra.mxu0 0.0
    %433 = vmatprep.subr.mxu0 0.0
    %434 = vmatpush2.msra.mxu0 0.0
    %435 = vmatprep.subr.mxu0 0.0
    %436 = vmatpush2.msra.mxu0 0.0
    %437 = vmatprep.subr.mxu0 0.0
    %438 = vmatpush2.msra.mxu0 0.0
    %439 = vmatprep.subr.mxu0 0.0
    %440 = vmatpush2.msra.mxu0 0.0
    %441 = vmatprep.subr.mxu0 0.0
    %442 = vmatpush2.msra.mxu0 0.0
    %443 = vmatprep.subr.mxu0 0.0
    %444 = vmatpush2.msra.mxu0 0.0
    %445 = vmatprep.mubr.f32.mxu0 0.0
    %446 = vmatmul.mubr.f32.gmra.mxu0 %v379
    %v447 = vpop.f32.mrf.mxu0
    %v448 = vadd.f32 0.0, %v447
    %v449 = vpop.f32.mrf.mxu0
    %450 = vdwg.mxu0
    %451 = vst.msk [vmem:[#allocation7] sm:$0xff] %vm77, %v372
    %452 = vst.msk [vmem:[#allocation7 + $0x8] sm:$0xff] %vm77, %v448
    %453 = vst.msk [vmem:[#allocation8] sm:$0xff] %vm276, %v297
    %454 = vst.msk [vmem:[#allocation8 + $0x8] sm:$0xff] %vm276, %v298
    // Predicated region
    $region22: #{tpu_custom_call.1} parent=1 // pred_check
      _
    $region23: #{tpu_custom_call.1} parent=1 // pred_check_branch
      %456 = sbr.rel (0) target = $region25
    $region24: #{tpu_custom_call.1} parent=1 // pred_region
      %s458 = ssub.s32 256, 256
      %459 = vsyncadd [#allocation4], %s458
      %s460 = sshll.u32 [#allocation7], 4
      %s461 = int_to_ptr.vmem [resolvable:$true] %s460
      %466 = dma.vmem_to_hbm [thread:$0]  %s461, 256, %s3, [#allocation4], 128, 128, 8
    $region25: #{tpu_custom_call.1} parent=1 // pred_fallthru
      _
    // Predicated region
    $region26: #{tpu_custom_call.1} parent=1 // pred_check
      _
    $region27: #{tpu_custom_call.1} parent=1 // pred_check_branch
      %468 = sbr.rel (0) target = $region29
    $region28: #{tpu_custom_call.1} parent=1 // pred_region
      %s470 = ssub.s32 256, 256
      %471 = vsyncadd [#allocation9], %s470
      %s472 = sshll.u32 [#allocation8], 4
      %s473 = int_to_ptr.vmem [resolvable:$true] %s472
      %478 = dma.vmem_to_hbm [thread:$0]  %s473, 256, %s4, [#allocation9], 128, 128, 8
    $region29: #{tpu_custom_call.1} parent=1 // pred_fallthru
      _
    // Predicated region
    $region30: #{tpu_custom_call.1} parent=1 // pred_check
      _
    $region31: #{tpu_custom_call.1} parent=1 // pred_check_branch
      %480 = sbr.rel (0) target = $region33
    $region32: #{tpu_custom_call.1} parent=1 // pred_region
      %481 = dma.done [#allocation4], 256
    $region33: #{tpu_custom_call.1} parent=1 // pred_fallthru
      _
    // Predicated region
    $region34: #{tpu_custom_call.1} parent=1 // pred_check
      _
    $region35: #{tpu_custom_call.1} parent=1 // pred_check_branch
      %483 = sbr.rel (0) target = $region37
    $region36: #{tpu_custom_call.1} parent=1 // pred_region
      %484 = dma.done [#allocation9], 256
    $region37: #{tpu_custom_call.1} parent=1 // pred_fallthru
      _
    %485 = vsyncpa [#allocation3], 1
    %486 = vsyncpa [#allocation6], 1
    %487 = vsyncpa [#allocation4], 1
    %488 = vsyncpa [#allocation9], 1

</llo_original>
